<compile_context>
chip_gen: v7x
topology: tpu7x:2x2x1
jax: 0.10.0
libtpu: 0.0.40
codegen_flags: <defaults>
</compile_context>

<pallas_src>
import math

import jax
import jax.numpy as jnp
from jax import lax
from jax.experimental import pallas as pl
from jax.experimental.pallas import tpu as pltpu

_PI = 3.14159265  # matches the constant used in the PyTorch module
_COS_THRESHOLDS = tuple(math.cos(j * _PI / 4.0) for j in range(1, 5))  # m = 4


def _angle_linear_kernel(x_ref, w_ref, rinv_w_ref, rinv_x_ref, xnorm_ref,
                         xnorm_il_ref, label_ref, out_ref):
    """Computes one (TB, TN) output tile.

    x_ref        : VMEM (TB, D)  bf16
    w_ref        : VMEM (TN, D)  bf16  (weight rows, zero-padded in N)
    rinv_w_ref   : VMEM (1, TN)  f32   1 / max(||w_row||, 1e-12)
    rinv_x_ref   : VMEM (TB, 1)  f32   1 / max(||x_row||, 1e-12)
    xnorm_ref    : VMEM (TB, 1)  f32   ||x_row||
    xnorm_il_ref : VMEM (TB, 1)  f32   ||x_row|| / (1 + lamb)
    label_ref    : VMEM (TB, 1)  i32   (padded rows hold -1)
    out_ref      : VMEM (TB, TN) f32
    """
    j = pl.program_id(0)                 # class-tile index (outer grid axis)
    tb, tn = out_ref.shape

    # bf16 MXU matmul against the (TN, D) weight block, f32 accumulation.
    # Contract the trailing dim of both operands -> no in-kernel transpose.
    s = lax.dot_general(x_ref[...], w_ref[...],
                        dimension_numbers=(((1,), (1,)), ((), ())),
                        preferred_element_type=jnp.float32)      # (TB, TN)

    # Fused post-scale: t = cos_theta * ||x|| (one broadcast multiply).
    t = s * rinv_w_ref[...]                                      # (TB, TN)

    x_norm = xnorm_ref[...]                                      # (TB, 1)

    # Label-column mask: (1, TN) iota vs (TB, 1) labels -> (TB, TN) bool.
    cols = j * tn + lax.broadcasted_iota(jnp.int32, (1, tn), 1)
    is_label = cols == label_ref[...]

    # cos_theta at the label column only (0 if the label is not in this tile).
    c_lbl = jnp.clip(
        jnp.sum(jnp.where(is_label, t, 0.0), axis=1, keepdims=True)
        * rinv_x_ref[...], -1.0, 1.0)                            # (TB, 1)

    # m = 4 margin on the label column: cos(4θ) via Chebyshev,
    # k = floor(4θ/π) via cosine thresholds, sign = (-1)^k accumulated.
    c2 = c_lbl * c_lbl
    cos_m = 8.0 * c2 * c2 - 8.0 * c2 + 1.0
    k = jnp.zeros_like(c_lbl)
    sign = jnp.ones_like(c_lbl)
    for thr in _COS_THRESHOLDS:
        ind = (c_lbl <= thr).astype(jnp.float32)
        k = k + ind
        sign = sign * (1.0 - 2.0 * ind)
    phi = sign * cos_m - 2.0 * k

    corr = (phi - c_lbl) * xnorm_il_ref[...]                     # (TB, 1)

    # clip(t, -||x||, +||x||) == clip(cos_theta, -1, 1) * ||x||  (||x|| >= 0).
    out_ref[...] = (jnp.clip(t, -x_norm, x_norm)
                    + jnp.where(is_label, corr, 0.0))


def _round_up(a, b):
    return -(-a // b) * b


def angle_linear(x, weight, label, lamb):
    """Pallas forward of AngleLinear (m=4). x:(B,D), weight:(N,D), label:(B,)."""
    B, D = x.shape
    N, Dw = weight.shape
    assert D == Dw

    # ---- tile selection (decoupled from divisibility; pad up to the tile) ---
    # Batch: <= 256 rows per tile, evenly split, sublane (8) aligned.
    n_bb = -(-B // 256)
    TB = _round_up(-(-B // n_bb), 8)
    B_pad = TB * n_bb

    # Class: as large as a ~24 MiB double-buffered VMEM budget allows
    # (leaves headroom everywhere, incl. v7x's 64 MiB/TC), lane (128) aligned.
    budget = 24 * 1024 * 1024
    tn_cap = 2048
    while tn_cap > 128:
        need = 2 * (TB * D * 2 + tn_cap * D * 2 + TB * tn_cap * 4
                    + tn_cap * 4 + TB * 16)
        if need <= budget:
            break
        tn_cap //= 2
    # NOTE: for very large D (>= ~4K) a third K grid axis ("arbitrary") with an
    # f32 accumulator scratch would bound per-block VMEM further; not needed at
    # the small feature sizes this module is used with.
    n_nb = -(-N // tn_cap)
    TN = _round_up(-(-N // n_nb), 128)
    # If the whole problem fits a single (1,1) grid, split the class axis so a
    # v7x megacore can shard the two class tiles across its TensorCores.
    if n_bb == 1 and n_nb == 1 and TN >= 256:
        TN = _round_up(TN // 2, 128)
        n_nb = -(-N // TN)
    N_pad = TN * n_nb

    # ---- wrapper-side precompute (tiny XLA ops) -----------------------------
    x32 = x.astype(jnp.float32)
    w32 = weight.astype(jnp.float32)

    norm_x = jnp.sqrt(jnp.sum(x32 * x32, axis=1, keepdims=True))      # (B, 1)
    rinv_x = 1.0 / jnp.maximum(norm_x, 1e-12)
    xnorm_il = norm_x * (1.0 / (1.0 + lamb))                          # (B, 1)
    rinv_w = 1.0 / jnp.maximum(
        jnp.sqrt(jnp.sum(w32 * w32, axis=1)), 1e-12)                  # (N,)

    # bf16 matmul operands (halves the dominant HBM stream, native MXU path).
    # In a training loop the padded bf16 weight should be cached across calls.
    x_p = jnp.pad(x32.astype(jnp.bfloat16), ((0, B_pad - B), (0, 0)))
    w_p = jnp.pad(w32.astype(jnp.bfloat16), ((0, N_pad - N), (0, 0)))
    rinv_w_p = jnp.pad(rinv_w.reshape(1, N), ((0, 0), (0, N_pad - N)))
    rinv_x_p = jnp.pad(rinv_x, ((0, B_pad - B), (0, 0)))
    xnorm_p = jnp.pad(norm_x, ((0, B_pad - B), (0, 0)))
    xnorm_il_p = jnp.pad(xnorm_il, ((0, B_pad - B), (0, 0)))
    label_p = jnp.pad(label.astype(jnp.int32).reshape(B, 1),
                      ((0, B_pad - B), (0, 0)), constant_values=-1)

    # Grid: class tiles OUTER, batch tiles INNER -> the large weight block's
    # index is unchanged across inner steps, so Pallas elides its re-DMA and
    # the weight is streamed from HBM exactly once.
    grid = (n_nb, n_bb)

    out = pl.pallas_call(
        _angle_linear_kernel,
        out_shape=jax.ShapeDtypeStruct((B_pad, N_pad), jnp.float32),
        grid_spec=pltpu.PrefetchScalarGridSpec(
            num_scalar_prefetch=0,
            grid=grid,
            in_specs=[
                pl.BlockSpec((TB, D), lambda j, i: (i, 0)),    # x (bf16)
                pl.BlockSpec((TN, D), lambda j, i: (j, 0)),    # weight (bf16)
                pl.BlockSpec((1, TN), lambda j, i: (0, j)),    # 1/||w||
                pl.BlockSpec((TB, 1), lambda j, i: (i, 0)),    # 1/||x||
                pl.BlockSpec((TB, 1), lambda j, i: (i, 0)),    # ||x||
                pl.BlockSpec((TB, 1), lambda j, i: (i, 0)),    # ||x||/(1+lamb)
                pl.BlockSpec((TB, 1), lambda j, i: (i, 0)),    # labels
            ],
            out_specs=pl.BlockSpec((TB, TN), lambda j, i: (i, j)),
        ),
        compiler_params=pltpu.CompilerParams(
            dimension_semantics=("parallel", "parallel"),
            vmem_limit_bytes=48 * 1024 * 1024),
        cost_estimate=pl.CostEstimate(
            flops=2 * B_pad * N_pad * D,
            transcendentals=0,
            bytes_accessed=(N_pad * D * 2          # weight: streamed once
                            + n_nb * B_pad * D * 2  # x: re-read per class tile
                            + B_pad * N_pad * 4     # output
                            + N_pad * 4 + 4 * n_nb * B_pad * 4)),
    )(x_p, w_p, rinv_w_p, rinv_x_p, xnorm_p, xnorm_il_p, label_p)
    return out[:B, :N]


def angle_linear_ref(x, w, label, lamb, matmul_dtype=jnp.float32):
    """Pure-JAX reference mirroring the PyTorch forward (m=4).

    matmul_dtype=jnp.bfloat16 reproduces the kernel's bf16 matmul operands for
    a tight numerical comparison; jnp.float32 gives the module's semantics.
    """
    norm_x = jnp.linalg.norm(x, axis=1, keepdims=True)
    norm_w = jnp.linalg.norm(w, axis=1, keepdims=True)
    s = jnp.dot(x.astype(matmul_dtype), w.astype(matmul_dtype).T,
                preferred_element_type=jnp.float32)
    c = jnp.clip(s / jnp.maximum(norm_x, 1e-12) / jnp.maximum(norm_w.T, 1e-12),
                 -1.0, 1.0)
    cm = 8.0 * c ** 4 - 8.0 * c ** 2 + 1.0
    theta = jnp.arccos(c)
    k = jnp.floor(4.0 * theta / _PI)
    sign = 1.0 - 2.0 * jnp.mod(k, 2.0)
    phi = sign * cm - 2.0 * k
    one_hot = jax.nn.one_hot(label, w.shape[0], dtype=jnp.float32)
    out = one_hot * (phi - c) / (1.0 + lamb) + c
    return out * norm_x


if __name__ == "__main__":
    key = jax.random.PRNGKey(0)
    lamb = max(5.0, 1000.0 * (1.0 + 0.12 * 1) ** (-1))   # iter = 1

    # ---- test 1: toy config (single-tile grid, padded N 16 -> 128) ----------
    B, D, N = 8, 32, 16
    k_x, k_w, k_l = jax.random.split(key, 3)
    x = jax.random.normal(k_x, (B, D), dtype=jnp.float32)
    bound = math.sqrt(6.0 / (D + N))                      # xavier_uniform
    w = jax.random.uniform(k_w, (N, D), dtype=jnp.float32,
                           minval=-bound, maxval=bound)
    label = jax.random.randint(k_l, (B,), 0, N, dtype=jnp.int32)

    out = jax.block_until_ready(angle_linear(x, w, label, lamb))
    assert out.shape == (B, N)
    # Tight check vs. a reference using the same bf16 matmul operands.
    ref_bf = angle_linear_ref(x, w, label, lamb, matmul_dtype=jnp.bfloat16)
    assert jnp.allclose(out, ref_bf, atol=2e-3, rtol=2e-3)
    # Loose check vs. the pure-f32 module semantics (bf16 matmul rounding).
    ref_f32 = angle_linear_ref(x, w, label, lamb)
    assert jnp.max(jnp.abs(out - ref_f32)) < 5e-2 * (
        1.0 + jnp.max(jnp.abs(ref_f32)))

    # ---- test 2: multi-tile grid (2 class tiles) with padding in N ----------
    B2, D2, N2 = 24, 64, 520
    k_x2, k_w2, k_l2 = jax.random.split(jax.random.PRNGKey(1), 3)
    x2 = jax.random.normal(k_x2, (B2, D2), dtype=jnp.float32)
    w2 = 0.1 * jax.random.normal(k_w2, (N2, D2), dtype=jnp.float32)
    label2 = jax.random.randint(k_l2, (B2,), 0, N2, dtype=jnp.int32)

    out2 = jax.block_until_ready(angle_linear(x2, w2, label2, lamb))
    assert out2.shape == (B2, N2)
    ref2_bf = angle_linear_ref(x2, w2, label2, lamb, matmul_dtype=jnp.bfloat16)
    assert jnp.allclose(out2, ref2_bf, atol=2e-3, rtol=2e-3)
    ref2_f32 = angle_linear_ref(x2, w2, label2, lamb)
    assert jnp.max(jnp.abs(out2 - ref2_f32)) < 5e-2 * (
        1.0 + jnp.max(jnp.abs(ref2_f32)))

    print("KERNEL_OK")
</pallas_src>

<mosaic_0001>
module attributes {stable_mosaic.version = 11 : i64} {
  func.func @_angle_linear_kernel(%arg0: i32, %arg1: i32, %arg2: memref<8x32xbf16, #tpu.memory_space<vmem>>, %arg3: memref<128x32xbf16, #tpu.memory_space<vmem>>, %arg4: memref<1x128xf32, #tpu.memory_space<vmem>>, %arg5: memref<8x1xf32, #tpu.memory_space<vmem>>, %arg6: memref<8x1xf32, #tpu.memory_space<vmem>>, %arg7: memref<8x1xf32, #tpu.memory_space<vmem>>, %arg8: memref<8x1xi32, #tpu.memory_space<vmem>>, %arg9: memref<8x128xf32, #tpu.memory_space<vmem>>) attributes {dimension_semantics = [#tpu.dimension_semantics<parallel>, #tpu.dimension_semantics<parallel>], iteration_bounds = array<i64: 1, 1>, scalar_prefetch = 0 : i64, scratch_operands = 0 : i64, tpu.core_type = #tpu.core_type<tc>, window_params = [{transform_indices = @transform_0, window_bounds = array<i64: 8, 32>}, {transform_indices = @transform_1, window_bounds = array<i64: 128, 32>}, {transform_indices = @transform_2, window_bounds = array<i64: 1, 128>}, {transform_indices = @transform_3, window_bounds = array<i64: 8, 1>}, {transform_indices = @transform_4, window_bounds = array<i64: 8, 1>}, {transform_indices = @transform_5, window_bounds = array<i64: 8, 1>}, {transform_indices = @transform_6, window_bounds = array<i64: 8, 1>}, {transform_indices = @transform_7, window_bounds = array<i64: 8, 128>}]} {
    %c0 = arith.constant 0 : index
    %c0_0 = arith.constant 0 : index
    %0 = vector.load %arg2[%c0, %c0_0] : memref<8x32xbf16, #tpu.memory_space<vmem>>, vector<8x32xbf16>
    %c0_1 = arith.constant 0 : index
    %c0_2 = arith.constant 0 : index
    %1 = vector.load %arg3[%c0_1, %c0_2] : memref<128x32xbf16, #tpu.memory_space<vmem>>, vector<128x32xbf16>
    %cst = arith.constant dense<0.000000e+00> : vector<8x128xf32>
    %2 = tpu.matmul %0, %1, %cst {dimension_numbers = #tpu.dot_dimension_numbers<[1], [1], [0], [0], [0, 0, 1, 0], [], []>} : vector<8x32xbf16>, vector<128x32xbf16>, vector<8x128xf32> -> vector<8x128xf32>
    %c0_3 = arith.constant 0 : index
    %c0_4 = arith.constant 0 : index
    %3 = vector.load %arg4[%c0_3, %c0_4] : memref<1x128xf32, #tpu.memory_space<vmem>>, vector<1x128xf32>
    %4 = vector.broadcast %3 : vector<1x128xf32> to vector<8x128xf32>
    %5 = arith.mulf %2, %4 : vector<8x128xf32>
    %c0_5 = arith.constant 0 : index
    %c0_6 = arith.constant 0 : index
    %6 = vector.load %arg6[%c0_5, %c0_6] : memref<8x1xf32, #tpu.memory_space<vmem>>, vector<8x1xf32>
    %c128_i32 = arith.constant 128 : i32
    %7 = arith.muli %arg0, %c128_i32 : i32
    %8 = tpu.iota {dimensions = array<i32: 1>} : vector<1x128xi32>
    %9 = vector.broadcast %7 : i32 to vector<1x128xi32>
    %10 = arith.addi %9, %8 : vector<1x128xi32>
    %c0_7 = arith.constant 0 : index
    %c0_8 = arith.constant 0 : index
    %11 = vector.load %arg8[%c0_7, %c0_8] : memref<8x1xi32, #tpu.memory_space<vmem>>, vector<8x1xi32>
    %12 = vector.broadcast %10 : vector<1x128xi32> to vector<8x128xi32>
    %13 = vector.broadcast %11 : vector<8x1xi32> to vector<8x128xi32>
    %14 = arith.cmpi eq, %12, %13 : vector<8x128xi32>
    %cst_9 = arith.constant 0.000000e+00 : f32
    %15 = vector.broadcast %cst_9 : f32 to vector<8x128xf32>
    %16 = arith.select %14, %5, %15 : vector<8x128xi1>, vector<8x128xf32>
    %cst_10 = arith.constant dense<0.000000e+00> : vector<8xf32>
    %17 = vector.multi_reduction <add>, %16, %cst_10 [1] : vector<8x128xf32> to vector<8xf32>
    %18 = vector.shape_cast %17 : vector<8xf32> to vector<8x1xf32>
    %c0_11 = arith.constant 0 : index
    %c0_12 = arith.constant 0 : index
    %19 = vector.load %arg5[%c0_11, %c0_12] : memref<8x1xf32, #tpu.memory_space<vmem>>, vector<8x1xf32>
    %20 = arith.mulf %18, %19 : vector<8x1xf32>
    %cst_13 = arith.constant -1.000000e+00 : f32
    %cst_14 = arith.constant 1.000000e+00 : f32
    %21 = vector.broadcast %cst_13 : f32 to vector<8x1xf32>
    %22 = arith.maximumf %21, %20 : vector<8x1xf32>
    %23 = vector.broadcast %cst_14 : f32 to vector<8x1xf32>
    %24 = arith.minimumf %23, %22 : vector<8x1xf32>
    %25 = arith.mulf %24, %24 : vector<8x1xf32>
    %cst_15 = arith.constant 8.000000e+00 : f32
    %26 = vector.broadcast %cst_15 : f32 to vector<8x1xf32>
    %27 = arith.mulf %26, %25 : vector<8x1xf32>
    %28 = arith.mulf %27, %25 : vector<8x1xf32>
    %cst_16 = arith.constant 8.000000e+00 : f32
    %29 = vector.broadcast %cst_16 : f32 to vector<8x1xf32>
    %30 = arith.mulf %29, %25 : vector<8x1xf32>
    %31 = arith.subf %28, %30 : vector<8x1xf32>
    %cst_17 = arith.constant 1.000000e+00 : f32
    %32 = vector.broadcast %cst_17 : f32 to vector<8x1xf32>
    %33 = arith.addf %31, %32 : vector<8x1xf32>
    %cst_18 = arith.constant 0.000000e+00 : f32
    %34 = vector.broadcast %cst_18 : f32 to vector<8x1xf32>
    %cst_19 = arith.constant 1.000000e+00 : f32
    %35 = vector.broadcast %cst_19 : f32 to vector<8x1xf32>
    %cst_20 = arith.constant 0.707106769 : f32
    %36 = vector.broadcast %cst_20 : f32 to vector<8x1xf32>
    %37 = arith.cmpf ole, %24, %36 : vector<8x1xf32>
    %38 = arith.extui %37 : vector<8x1xi1> to vector<8x1xi32>
    %39 = arith.sitofp %38 : vector<8x1xi32> to vector<8x1xf32>
    %40 = arith.addf %34, %39 : vector<8x1xf32>
    %cst_21 = arith.constant 2.000000e+00 : f32
    %41 = vector.broadcast %cst_21 : f32 to vector<8x1xf32>
    %42 = arith.mulf %41, %39 : vector<8x1xf32>
    %cst_22 = arith.constant 1.000000e+00 : f32
    %43 = vector.broadcast %cst_22 : f32 to vector<8x1xf32>
    %44 = arith.subf %43, %42 : vector<8x1xf32>
    %45 = arith.mulf %35, %44 : vector<8x1xf32>
    %cst_23 = arith.constant 1.79489656E-9 : f32
    %46 = vector.broadcast %cst_23 : f32 to vector<8x1xf32>
    %47 = arith.cmpf ole, %24, %46 : vector<8x1xf32>
    %48 = arith.extui %47 : vector<8x1xi1> to vector<8x1xi32>
    %49 = arith.sitofp %48 : vector<8x1xi32> to vector<8x1xf32>
    %50 = arith.addf %40, %49 : vector<8x1xf32>
    %cst_24 = arith.constant 2.000000e+00 : f32
    %51 = vector.broadcast %cst_24 : f32 to vector<8x1xf32>
    %52 = arith.mulf %51, %49 : vector<8x1xf32>
    %cst_25 = arith.constant 1.000000e+00 : f32
    %53 = vector.broadcast %cst_25 : f32 to vector<8x1xf32>
    %54 = arith.subf %53, %52 : vector<8x1xf32>
    %55 = arith.mulf %45, %54 : vector<8x1xf32>
    %cst_26 = arith.constant -0.707106769 : f32
    %56 = vector.broadcast %cst_26 : f32 to vector<8x1xf32>
    %57 = arith.cmpf ole, %24, %56 : vector<8x1xf32>
    %58 = arith.extui %57 : vector<8x1xi1> to vector<8x1xi32>
    %59 = arith.sitofp %58 : vector<8x1xi32> to vector<8x1xf32>
    %60 = arith.addf %50, %59 : vector<8x1xf32>
    %cst_27 = arith.constant 2.000000e+00 : f32
    %61 = vector.broadcast %cst_27 : f32 to vector<8x1xf32>
    %62 = arith.mulf %61, %59 : vector<8x1xf32>
    %cst_28 = arith.constant 1.000000e+00 : f32
    %63 = vector.broadcast %cst_28 : f32 to vector<8x1xf32>
    %64 = arith.subf %63, %62 : vector<8x1xf32>
    %65 = arith.mulf %55, %64 : vector<8x1xf32>
    %cst_29 = arith.constant -1.000000e+00 : f32
    %66 = vector.broadcast %cst_29 : f32 to vector<8x1xf32>
    %67 = arith.cmpf ole, %24, %66 : vector<8x1xf32>
    %68 = arith.extui %67 : vector<8x1xi1> to vector<8x1xi32>
    %69 = arith.sitofp %68 : vector<8x1xi32> to vector<8x1xf32>
    %70 = arith.addf %60, %69 : vector<8x1xf32>
    %cst_30 = arith.constant 2.000000e+00 : f32
    %71 = vector.broadcast %cst_30 : f32 to vector<8x1xf32>
    %72 = arith.mulf %71, %69 : vector<8x1xf32>
    %cst_31 = arith.constant 1.000000e+00 : f32
    %73 = vector.broadcast %cst_31 : f32 to vector<8x1xf32>
    %74 = arith.subf %73, %72 : vector<8x1xf32>
    %75 = arith.mulf %65, %74 : vector<8x1xf32>
    %76 = arith.mulf %75, %33 : vector<8x1xf32>
    %cst_32 = arith.constant 2.000000e+00 : f32
    %77 = vector.broadcast %cst_32 : f32 to vector<8x1xf32>
    %78 = arith.mulf %77, %70 : vector<8x1xf32>
    %79 = arith.subf %76, %78 : vector<8x1xf32>
    %80 = arith.subf %79, %24 : vector<8x1xf32>
    %c0_33 = arith.constant 0 : index
    %c0_34 = arith.constant 0 : index
    %81 = vector.load %arg7[%c0_33, %c0_34] : memref<8x1xf32, #tpu.memory_space<vmem>>, vector<8x1xf32>
    %82 = arith.mulf %80, %81 : vector<8x1xf32>
    %cst_35 = arith.constant 0.000000e+00 : f32
    %83 = vector.broadcast %cst_35 : f32 to vector<8x1xf32>
    %84 = arith.subf %83, %6 : vector<8x1xf32>
    %85 = vector.broadcast %84 : vector<8x1xf32> to vector<8x128xf32>
    %86 = arith.maximumf %85, %5 : vector<8x128xf32>
    %87 = vector.broadcast %6 : vector<8x1xf32> to vector<8x128xf32>
    %88 = arith.minimumf %87, %86 : vector<8x128xf32>
    %cst_36 = arith.constant 0.000000e+00 : f32
    %89 = vector.shape_cast %82 : vector<8x1xf32> to vector<8x1xf32>
    %90 = vector.broadcast %89 : vector<8x1xf32> to vector<8x128xf32>
    %91 = vector.broadcast %cst_36 : f32 to vector<8x128xf32>
    %92 = arith.select %14, %90, %91 : vector<8x128xi1>, vector<8x128xf32>
    %93 = arith.addf %88, %92 : vector<8x128xf32>
    %c0_37 = arith.constant 0 : index
    %c0_38 = arith.constant 0 : index
    %94 = vector.load %arg9[%c0_37, %c0_38] : memref<8x128xf32, #tpu.memory_space<vmem>>, vector<8x128xf32>
    tpu.vector_store %arg9[%c0_37, %c0_38], %93 {strides = array<i32>} : memref<8x128xf32, #tpu.memory_space<vmem>>, vector<8x128xf32>,
    return
  }
  func.func @transform_0(%arg0: i32, %arg1: i32) -> (i32, i32) {
    %c0_i32 = arith.constant 0 : i32
    %c0_i32_0 = arith.constant 0 : i32
    return %arg1, %c0_i32 : i32, i32
  }
  func.func @transform_1(%arg0: i32, %arg1: i32) -> (i32, i32) {
    %c0_i32 = arith.constant 0 : i32
    %c0_i32_0 = arith.constant 0 : i32
    return %arg0, %c0_i32 : i32, i32
  }
  func.func @transform_2(%arg0: i32, %arg1: i32) -> (i32, i32) {
    %c0_i32 = arith.constant 0 : i32
    %c0_i32_0 = arith.constant 0 : i32
    return %c0_i32, %arg0 : i32, i32
  }
  func.func @transform_3(%arg0: i32, %arg1: i32) -> (i32, i32) {
    %c0_i32 = arith.constant 0 : i32
    %c0_i32_0 = arith.constant 0 : i32
    return %arg1, %c0_i32 : i32, i32
  }
  func.func @transform_4(%arg0: i32, %arg1: i32) -> (i32, i32) {
    %c0_i32 = arith.constant 0 : i32
    %c0_i32_0 = arith.constant 0 : i32
    return %arg1, %c0_i32 : i32, i32
  }
  func.func @transform_5(%arg0: i32, %arg1: i32) -> (i32, i32) {
    %c0_i32 = arith.constant 0 : i32
    %c0_i32_0 = arith.constant 0 : i32
    return %arg1, %c0_i32 : i32, i32
  }
  func.func @transform_6(%arg0: i32, %arg1: i32) -> (i32, i32) {
    %c0_i32 = arith.constant 0 : i32
    %c0_i32_0 = arith.constant 0 : i32
    return %arg1, %c0_i32 : i32, i32
  }
  func.func @transform_7(%arg0: i32, %arg1: i32) -> (i32, i32) {
    %c0_i32 = arith.constant 0 : i32
    return %arg1, %arg0 : i32, i32
  }
}

</mosaic_0001>

<llo_original>
// kernel: tpu_custom_call.1
$region0: #{tpu_custom_call.1}
  #allocation0 [shape = 'u32[]', space=smem, size = 0x4, offset = 0x4, fixed_abs, tag = 'smem constant byte address 0x4 - core index']
  #allocation1 [shape = 'u32[144,128]{1,0:T(1,128)}', space=vmem, size = 0x12000, scoped, tag = 'internal scratch']
  %s0 = inlined_call_operand.vmem [shape: bf16[8,32], index: 0, kind: input, shape index: {}]
  %s1 = inlined_call_operand.vmem [shape: bf16[128,32], index: 1, kind: input, shape index: {}]
  %s2 = inlined_call_operand.vmem [shape: f32[1,128], index: 2, kind: input, shape index: {}]
  %s3 = inlined_call_operand.vmem [shape: f32[8,1], index: 3, kind: input, shape index: {}]
  %s4 = inlined_call_operand.vmem [shape: f32[8,1], index: 4, kind: input, shape index: {}]
  %s5 = inlined_call_operand.vmem [shape: f32[8,1], index: 5, kind: input, shape index: {}]
  %s6 = inlined_call_operand.vmem [shape: s32[8,1], index: 6, kind: input, shape index: {}]
  %s7 = inlined_call_operand.hbm [shape: f32[8,128], index: 7, kind: output, shape index: {}]
  %s8 = sld [smem:[#allocation0]]
  $region38: #{tpu_custom_call.1} parent=0
    _
  %s10 = ssub.s32 1, %s8
  %s11 = scalar_select 0, %s10, %s8
  $region1: #{tpu_custom_call.1} parent=0
    #allocation2 [shape = 'u8[4096]{0}', space=vmem, size = 0x1000, scoped, tag = 'output window, operand 0, single buffered']
    #allocation3 [shape = 's32[1]{0}', space=sflag, size = 0x4, scoped, tag = 'scoped memory for tpu_custom_call.1']
    %12 = vsyncpa [#allocation3], 0
    // Predicated region
    $region2: #{tpu_custom_call.1} parent=1 // pred_check
      _
    $region3: #{tpu_custom_call.1} parent=1 // pred_check_branch
      %14 = sbr.rel (0) target = $region5
    $region4: #{tpu_custom_call.1} parent=1 // pred_region
      _
    $region5: #{tpu_custom_call.1} parent=1 // pred_fallthru
      _
    // Predicated region
    $region6: #{tpu_custom_call.1} parent=1 // pred_check
      _
    $region7: #{tpu_custom_call.1} parent=1 // pred_check_branch
      %16 = sbr.rel (0) target = $region9
    $region8: #{tpu_custom_call.1} parent=1 // pred_region
      _
    $region9: #{tpu_custom_call.1} parent=1 // pred_fallthru
      _
    // Predicated region
    $region10: #{tpu_custom_call.1} parent=1 // pred_check
      _
    $region11: #{tpu_custom_call.1} parent=1 // pred_check_branch
      %18 = sbr.rel (0) target = $region13
    $region12: #{tpu_custom_call.1} parent=1 // pred_region
      _
    $region13: #{tpu_custom_call.1} parent=1 // pred_fallthru
      _
    // Predicated region
    $region14: #{tpu_custom_call.1} parent=1 // pred_check
      _
    $region15: #{tpu_custom_call.1} parent=1 // pred_check_branch
      %20 = sbr.rel (0) target = $region17
    $region16: #{tpu_custom_call.1} parent=1 // pred_region
      _
    $region17: #{tpu_custom_call.1} parent=1 // pred_fallthru
      _
    // Predicated region
    $region18: #{tpu_custom_call.1} parent=1 // pred_check
      _
    $region19: #{tpu_custom_call.1} parent=1 // pred_check_branch
      %22 = sbr.rel (0) target = $region21
    $region20: #{tpu_custom_call.1} parent=1 // pred_region
      _
    $region21: #{tpu_custom_call.1} parent=1 // pred_fallthru
      _
    // Predicated region
    $region22: #{tpu_custom_call.1} parent=1 // pred_check
      _
    $region23: #{tpu_custom_call.1} parent=1 // pred_check_branch
      %24 = sbr.rel (0) target = $region25
    $region24: #{tpu_custom_call.1} parent=1 // pred_region
      _
    $region25: #{tpu_custom_call.1} parent=1 // pred_fallthru
      _
    // Predicated region
    $region26: #{tpu_custom_call.1} parent=1 // pred_check
      _
    $region27: #{tpu_custom_call.1} parent=1 // pred_check_branch
      %26 = sbr.rel (0) target = $region29
    $region28: #{tpu_custom_call.1} parent=1 // pred_region
      _
    $region29: #{tpu_custom_call.1} parent=1 // pred_fallthru
      _
    %v28 = vld [vmem:[%s0] sm:$0xf]
    %v29 = vld [vmem:[%s1] sm:$0xf]
    %v30 = vld [vmem:[%s1 + $0x4] sm:$0xf]
    %v31 = vld [vmem:[%s1 + $0x8] sm:$0xf]
    %v32 = vld [vmem:[%s1 + $0xc] sm:$0xf]
    %v33 = vld [vmem:[%s1 + $0x10] sm:$0xf]
    %v34 = vld [vmem:[%s1 + $0x14] sm:$0xf]
    %v35 = vld [vmem:[%s1 + $0x18] sm:$0xf]
    %v36 = vld [vmem:[%s1 + $0x1c] sm:$0xf]
    %v37 = vld [vmem:[%s1 + $0x20] sm:$0xf]
    %v38 = vld [vmem:[%s1 + $0x24] sm:$0xf]
    %v39 = vld [vmem:[%s1 + $0x28] sm:$0xf]
    %v40 = vld [vmem:[%s1 + $0x2c] sm:$0xf]
    %v41 = vld [vmem:[%s1 + $0x30] sm:$0xf]
    %v42 = vld [vmem:[%s1 + $0x34] sm:$0xf]
    %v43 = vld [vmem:[%s1 + $0x38] sm:$0xf]
    %v44 = vld [vmem:[%s1 + $0x3c] sm:$0xf]
    %v61 = vunpack.c.l.b16 %v29
    %v62 = vunpack.c.l.b16 %v30
    %v63 = vunpack.c.l.b16 %v31
    %v64 = vunpack.c.l.b16 %v32
    %v65 = vunpack.c.l.b16 %v33
    %v66 = vunpack.c.l.b16 %v34
    %v67 = vunpack.c.l.b16 %v35
    %v68 = vunpack.c.l.b16 %v36
    %v69 = vunpack.c.l.b16 %v37
    %v70 = vunpack.c.l.b16 %v38
    %v71 = vunpack.c.l.b16 %v39
    %v72 = vunpack.c.l.b16 %v40
    %v73 = vunpack.c.l.b16 %v41
    %v74 = vunpack.c.l.b16 %v42
    %v75 = vunpack.c.l.b16 %v43
    %v76 = vunpack.c.l.b16 %v44
    %v77 = vpack.c.b16 %v62, %v61
    %v78 = vpack.c.b16 %v64, %v63
    %v79 = vpack.c.b16 %v66, %v65
    %v80 = vpack.c.b16 %v68, %v67
    %v81 = vpack.c.b16 %v70, %v69
    %v82 = vpack.c.b16 %v72, %v71
    %v83 = vpack.c.b16 %v74, %v73
    %v84 = vpack.c.b16 %v76, %v75
    %vm85 = vcmask 261120
    %v87 = vsel %vm85, %v28, 0
    %v90 = vsel %vm85, %v77, 0
    %v93 = vsel %vm85, %v78, 0
    %v96 = vsel %vm85, %v79, 0
    %v99 = vsel %vm85, %v80, 0
    %v102 = vsel %vm85, %v81, 0
    %v105 = vsel %vm85, %v82, 0
    %v108 = vsel %vm85, %v83, 0
    %v111 = vsel %vm85, %v84, 0
    %113 = vmatprep.subr.bf16.mxu0 0
    %114 = vmatpush1.bf16.xpose.msra.mxu0 %v90
    %115 = vmatprep.subr.bf16.mxu0 0
    %116 = vmatpush1.bf16.xpose.msra.mxu0 %v93
    %117 = vmatprep.subr.bf16.mxu0 0
    %118 = vmatpush1.bf16.xpose.msra.mxu0 %v96
    %119 = vmatprep.subr.bf16.mxu0 0
    %120 = vmatpush1.bf16.xpose.msra.mxu0 %v99
    %121 = vmatprep.subr.bf16.mxu0 0
    %122 = vmatpush1.bf16.xpose.msra.mxu0 %v102
    %123 = vmatprep.subr.bf16.mxu0 0
    %124 = vmatpush1.bf16.xpose.msra.mxu0 %v105
    %125 = vmatprep.subr.bf16.mxu0 0
    %126 = vmatpush1.bf16.xpose.msra.mxu0 %v108
    %127 = vmatprep.subr.bf16.mxu0 0
    %128 = vmatpush1.bf16.xpose.msra.mxu0 %v111
    %129 = vmatprep.subr.bf16.mxu0 0
    %130 = vmatpush1.bf16.xpose.msra.mxu0 0
    %131 = vmatprep.subr.bf16.mxu0 0
    %132 = vmatpush1.bf16.xpose.msra.mxu0 0
    %133 = vmatprep.subr.bf16.mxu0 0
    %134 = vmatpush1.bf16.xpose.msra.mxu0 0
    %135 = vmatprep.subr.bf16.mxu0 0
    %136 = vmatpush1.bf16.xpose.msra.mxu0 0
    %137 = vmatprep.subr.bf16.mxu0 0
    %138 = vmatpush1.bf16.xpose.msra.mxu0 0
    %139 = vmatprep.subr.bf16.mxu0 0
    %140 = vmatpush1.bf16.xpose.msra.mxu0 0
    %141 = vmatprep.subr.bf16.mxu0 0
    %142 = vmatpush1.bf16.xpose.msra.mxu0 0
    %143 = vmatprep.subr.bf16.mxu0 0
    %144 = vmatpush1.bf16.xpose.msra.mxu0 0
    %145 = vmatprep.mubr.bf16.mxu0 0
    %146 = vmatmul.mubr.bf16.gmra.mrb[0].mxu0 %v87
    %v147 = vpop.f32.mrb[0].mxu0
    %v148 = vadd.f32 0.0, %v147
    %v149 = vpop.f32.mrb[0].mxu0
    %v150 = vpop.f32.mrb[0].mxu0
    %v151 = vpop.f32.mrb[0].mxu0
    %152 = vdwg.mxu0
    %v153 = vld [vmem:[%s2] sm:$0x1]
    %v155 = vlaneseq
    %v156 = vshrl.u32 %v155, 7
    %v157 = vsub.s32 0, %v156
    %v158 = vrot.slane %v153, %v157
    %v160 = vmul.f32 %v148, %v158
    %v161 = vld [vmem:[%s4] sm:$0xff]
    %s162 = smul.u32 0, 128
    %v163 = vlaneseq
    %v164 = vand.u32 %v163, 127
    %v165 = vstv %s162
    %v166 = vadd.s32 %v165, %v164
    %v167 = vld [vmem:[%s6] sm:$0xff]
    %168 = vset.pattern.permute.xlu0 0
    %169 = vperm.xlu0 %168, %v167
    %v170 = vpop.permute.xlu0 %169
    %vm171 = vcmp.eq.s32.totalorder %v166, %v170
    %v172 = vsel %vm171, %v160, 0.0
    %173 = vadd.xlane.f32.xlu0 %v172
    %v174 = vpop.xlane.xlu0 %173
    %v175 = vld [vmem:[%s3] sm:$0xff]
    %v176 = vmul.f32 %v174, %v175
    %v177 = vmax.f32 %v176, -1.0
    %v178 = vmin.f32 %v177, 1.0
    %v179 = vmul.f32 %v178, %v178
    %v180 = vmul.f32 %v179, 8.0
    %v181 = vmul.f32 %v180, %v179
    %v182 = vsub.f32 %v181, %v180
    %v183 = vadd.f32 %v182, 1.0
    %vm184 = vcmp.le.f32.partialorder %v178, 0.70710677
    %v185 = vsel %vm184, 1, 0
    %v186 = vcvt.s32.f32 %v185
    %v187 = vadd.f32 %v186, 0.0
    %v188 = vmul.f32 %v186, 2.0
    %v189 = vsub.f32 1.0, %v188
    %vm190 = vcmp.le.f32.partialorder %v178, 1.7948966e-09
    %v191 = vsel %vm190, 1, 0
    %v192 = vcvt.s32.f32 %v191
    %v193 = vadd.f32 %v187, %v192
    %v194 = vmul.f32 %v192, 2.0
    %v195 = vsub.f32 1.0, %v194
    %v196 = vmul.f32 %v189, %v195
    %vm197 = vcmp.le.f32.partialorder %v178, -0.70710677
    %v198 = vsel %vm197, 1, 0
    %v199 = vcvt.s32.f32 %v198
    %v200 = vadd.f32 %v193, %v199
    %v201 = vmul.f32 %v199, 2.0
    %v202 = vsub.f32 1.0, %v201
    %v203 = vmul.f32 %v196, %v202
    %vm204 = vcmp.le.f32.partialorder %v178, -1.0
    %v205 = vsel %vm204, 1, 0
    %v206 = vcvt.s32.f32 %v205
    %v207 = vadd.f32 %v200, %v206
    %v208 = vmul.f32 %v206, 2.0
    %v209 = vsub.f32 1.0, %v208
    %v210 = vmul.f32 %v203, %v209
    %v211 = vmul.f32 %v210, %v183
    %v212 = vmul.f32 %v207, 2.0
    %v213 = vsub.f32 %v211, %v212
    %v214 = vsub.f32 %v213, %v178
    %v215 = vld [vmem:[%s5] sm:$0xff]
    %v216 = vmul.f32 %v214, %v215
    %v217 = vsub.f32 0.0, %v161
    %219 = vset.pattern.permute.xlu0 0
    %220 = vperm.xlu0 %219, %v217
    %v221 = vpop.permute.xlu0 %220
    %v223 = vmax.f32 %v221, %v160
    %225 = vset.pattern.permute.xlu0 0
    %226 = vperm.xlu0 %225, %v161
    %v227 = vpop.permute.xlu0 %226
    %v229 = vmin.f32 %v227, %v223
    %231 = vset.pattern.permute.xlu0 0
    %232 = vperm.xlu0 %231, %v216
    %v233 = vpop.permute.xlu0 %232
    %v235 = vsel %vm171, %v233, 0.0
    %v236 = vadd.f32 %v229, %v235
    %237 = vst [vmem:[#allocation2] sm:$0xff] %v236
    // Predicated region
    $region30: #{tpu_custom_call.1} parent=1 // pred_check
      _
    $region31: #{tpu_custom_call.1} parent=1 // pred_check_branch
      %239 = sbr.rel (0) target = $region33
    $region32: #{tpu_custom_call.1} parent=1 // pred_region
      %s241 = ssub.s32 128, 128
      %242 = vsyncadd [#allocation3], %s241
      %s244 = sshll.u32 [#allocation2], 4
      %s245 = int_to_ptr.vmem [resolvable:$true] %s244
      %247 = dma.vmem_to_hbm [thread:$0]  %s245, 128, %s7, [#allocation3]
    $region33: #{tpu_custom_call.1} parent=1 // pred_fallthru
      _
    // Predicated region
    $region34: #{tpu_custom_call.1} parent=1 // pred_check
      _
    $region35: #{tpu_custom_call.1} parent=1 // pred_check_branch
      %249 = sbr.rel (0) target = $region37
    $region36: #{tpu_custom_call.1} parent=1 // pred_region
      %250 = dma.done [#allocation3], 128
    $region37: #{tpu_custom_call.1} parent=1 // pred_fallthru
      _
    %251 = vsyncpa [#allocation3], 1

</llo_original>
